<compile_context>
chip_gen: v5e
topology: v5e:2x2
jax: 0.10.0
libtpu: 0.0.40
codegen_flags: <defaults>
</compile_context>

<pallas_src>
import functools

import jax
import jax.numpy as jnp
from jax import lax
from jax.experimental import pallas as pl
from jax.experimental.pallas import tpu as pltpu

EPS = 1e-5     # PyTorch BatchNorm2d default
LANE = 128     # TPU lane width


def _round_up(v, m):
    return (v + m - 1) // m * m


# ----------------------------------------------------------------------------- #
# Pallas kernel: whole Block for one batch element (NHWC, channels on lanes).
# The kernel always computes the depthwise at spatial stride 1; stride-2 blocks
# are subsampled by the wrapper (and have no shortcut per the PyTorch module).
# ----------------------------------------------------------------------------- #
def _block_kernel(x_ref,                      # (1, H, W, Cin_p)   compute dtype
                  w1_ref, b1_ref,             # (Cin_p, P_p), (1, P_p)
                  w2_ref, b2_ref,             # (3, 3, P_p), (1, P_p)      f32
                  w3_ref, b3_ref,             # (P_p, Cout_p), (1, Cout_p)
                  *rest,                      # [ws_ref, bs_ref,] o_ref, pad_buf
                  shortcut):                  # "identity" | "conv" | "none"
    if shortcut == "conv":
        ws_ref, bs_ref, o_ref, pad_buf = rest
    else:
        ws_ref = bs_ref = None
        o_ref, pad_buf = rest

    _, H, W, Cin = x_ref.shape
    P = w1_ref.shape[1]
    Cout = w3_ref.shape[1]

    x = x_ref[0].reshape(H * W, Cin)

    # ---- expand: 1x1 conv (BN scale pre-folded) + bias + ReLU ---------------- #
    t1 = jnp.dot(x, w1_ref[...], preferred_element_type=jnp.float32)
    t1 = jnp.maximum(t1 + b1_ref[...], 0.0)                      # (H*W, P) f32

    # ---- depthwise 3x3, padding=1 (BN scale pre-folded) + bias + ReLU -------- #
    # Only the 1-px halo is zeroed each step (interior is fully overwritten),
    # which keeps every grid step self-contained -> safe under "parallel" batch
    # axis sharding across TensorCores.
    zero_row = jnp.zeros((1, W + 2, P), jnp.float32)
    zero_col = jnp.zeros((H, 1, P), jnp.float32)
    pad_buf[0:1, :, :] = zero_row
    pad_buf[H + 1:H + 2, :, :] = zero_row
    pad_buf[1:H + 1, 0:1, :] = zero_col
    pad_buf[1:H + 1, W + 1:W + 2, :] = zero_col
    pad_buf[1:H + 1, 1:W + 1, :] = t1.reshape(H, W, P)

    acc = jnp.zeros((H, W, P), jnp.float32)
    for kh in range(3):
        rows = pad_buf[kh:kh + H, :, :]                          # (H, W+2, P)
        for kw in range(3):
            acc = acc + rows[:, kw:kw + W, :] * w2_ref[kh, kw, :].reshape(1, 1, P)
    t2 = jnp.maximum(acc + b2_ref[...].reshape(1, 1, P), 0.0)    # (H, W, P)

    # ---- project: 1x1 conv (BN scale pre-folded) + bias ---------------------- #
    t3 = jnp.dot(t2.reshape(H * W, P).astype(w3_ref.dtype), w3_ref[...],
                 preferred_element_type=jnp.float32)             # (H*W, Cout_p)
    t3 = t3 + b3_ref[...]

    # ---- shortcut (stride==1 only; "none" for stride 2) ---------------------- #
    if shortcut == "identity":
        t3 = t3 + x.astype(jnp.float32)
    elif shortcut == "conv":
        sc = jnp.dot(x, ws_ref[...], preferred_element_type=jnp.float32)
        t3 = t3 + (sc + bs_ref[...])

    # Lane-dense store: Cout_p is a multiple of 128.
    o_ref[0] = t3.reshape(H, W, Cout).astype(o_ref.dtype)


# ----------------------------------------------------------------------------- #
# Wrapper: NCHW in / NCHW out (to match PyTorch); params already prepared.
# ----------------------------------------------------------------------------- #
def mobilenetv2_block(x_nchw, kparams, *, stride, in_planes, out_planes,
                      compute_dtype=jnp.float32):
    N, Cin, H, W = x_nchw.shape
    assert Cin == in_planes
    Cin_p = _round_up(Cin, LANE)
    P_p = kparams["w1"].shape[1]
    Cout_p = kparams["w3"].shape[1]
    assert kparams["w1"].shape[0] == Cin_p

    if stride != 1:
        shortcut = "none"
    elif in_planes == out_planes:
        shortcut = "identity"
    else:
        shortcut = "conv"

    # NCHW -> NHWC with channels zero-padded to a lane multiple (one fused XLA op).
    x_nhwc = jnp.transpose(x_nchw, (0, 2, 3, 1)).astype(compute_dtype)
    if Cin_p != Cin:
        x_nhwc = jnp.pad(x_nhwc, ((0, 0), (0, 0), (0, 0), (0, Cin_p - Cin)))

    kernel = functools.partial(_block_kernel, shortcut=shortcut)

    def full(*dims):
        return pl.BlockSpec(dims, lambda n: (0,) * len(dims))

    in_specs = [
        pl.BlockSpec((1, H, W, Cin_p), lambda n: (n, 0, 0, 0)),
        full(Cin_p, P_p), full(1, P_p),            # w1, b1
        full(3, 3, P_p), full(1, P_p),             # w2, b2
        full(P_p, Cout_p), full(1, Cout_p),        # w3, b3
    ]
    args = [x_nhwc, kparams["w1"], kparams["b1"], kparams["w2"], kparams["b2"],
            kparams["w3"], kparams["b3"]]
    if shortcut == "conv":
        # Only DMA shortcut params when they are actually used.
        in_specs += [full(Cin_p, Cout_p), full(1, Cout_p)]
        args += [kparams["ws"], kparams["bs"]]

    out_nhwc = pl.pallas_call(
        kernel,
        out_shape=jax.ShapeDtypeStruct((N, H, W, Cout_p), jnp.float32),
        grid_spec=pltpu.PrefetchScalarGridSpec(
            num_scalar_prefetch=0,
            grid=(N,),
            in_specs=in_specs,
            out_specs=pl.BlockSpec((1, H, W, Cout_p), lambda n: (n, 0, 0, 0)),
            scratch_shapes=[pltpu.VMEM((H + 2, W + 2, P_p), jnp.float32)],
        ),
        compiler_params=pltpu.CompilerParams(
            dimension_semantics=("parallel",),          # batch is independent
            vmem_limit_bytes=48 * 1024 * 1024,
        ),
    )(*args)

    out = out_nhwc
    if stride != 1:
        out = out[:, ::stride, ::stride, :]     # spatial subsample (no shortcut)
    out = out[..., :out_planes]                 # drop channel padding
    return jnp.transpose(out, (0, 3, 1, 2))     # back to NCHW


# ----------------------------------------------------------------------------- #
# One-time host-side prep: fold BN into weights, go channels-last, pad to lanes.
# ----------------------------------------------------------------------------- #
def prepare_block_params(tp, *, compute_dtype=jnp.float32):
    def fold(g, b, m, v):
        s = g / jnp.sqrt(v + EPS)
        return s, b - m * s

    w1 = tp["w1"][:, :, 0, 0].T                       # (Cin, P)
    w2 = jnp.transpose(tp["w2"][:, 0], (1, 2, 0))     # (3, 3, P)
    w3 = tp["w3"][:, :, 0, 0].T                       # (P, Cout)
    s1, b1 = fold(*tp["bn1"])
    s2, b2 = fold(*tp["bn2"])
    s3, b3 = fold(*tp["bn3"])

    Cin, P = w1.shape
    Cout = w3.shape[1]
    Cin_p, P_p, Cout_p = (_round_up(c, LANE) for c in (Cin, P, Cout))

    def pad_mat(a, r, c):
        return jnp.pad(a, ((0, r - a.shape[0]), (0, c - a.shape[1])))

    def pad_vec(v, c):
        return jnp.pad(v, (0, c - v.shape[0])).reshape(1, c)

    params = dict(
        w1=pad_mat(w1 * s1[None, :], Cin_p, P_p).astype(compute_dtype),
        b1=pad_vec(b1, P_p).astype(jnp.float32),
        w2=jnp.pad(w2 * s2[None, None, :],
                   ((0, 0), (0, 0), (0, P_p - P))).astype(jnp.float32),
        b2=pad_vec(b2, P_p).astype(jnp.float32),
        w3=pad_mat(w3 * s3[None, :], P_p, Cout_p).astype(compute_dtype),
        b3=pad_vec(b3, Cout_p).astype(jnp.float32),
    )
    if "ws" in tp:
        ws = tp["ws"][:, :, 0, 0].T                   # (Cin, Cout)
        ss, bs = fold(*tp["bns"])
        params["ws"] = pad_mat(ws * ss[None, :], Cin_p, Cout_p).astype(compute_dtype)
        params["bs"] = pad_vec(bs, Cout_p).astype(jnp.float32)
    return params


# ----------------------------------------------------------------------------- #
# Deterministic parameter construction (PyTorch shapes / eval-mode BN stats).
# ----------------------------------------------------------------------------- #
def make_params(key, in_planes, out_planes, expansion, stride):
    P = expansion * in_planes
    keys = jax.random.split(key, 20)

    def bn(kg, kb, km, kv, c):
        gamma = 0.5 + jax.random.uniform(kg, (c,), jnp.float32)
        beta = 0.1 * jax.random.normal(kb, (c,), jnp.float32)
        mean = 0.1 * jax.random.normal(km, (c,), jnp.float32)
        var = 0.5 + jax.random.uniform(kv, (c,), jnp.float32)
        return gamma, beta, mean, var

    tp = dict(
        w1=0.1 * jax.random.normal(keys[0], (P, in_planes, 1, 1), jnp.float32),
        w2=0.1 * jax.random.normal(keys[1], (P, 1, 3, 3), jnp.float32),
        w3=0.1 * jax.random.normal(keys[2], (out_planes, P, 1, 1), jnp.float32),
        bn1=bn(keys[4], keys[5], keys[6], keys[7], P),
        bn2=bn(keys[8], keys[9], keys[10], keys[11], P),
        bn3=bn(keys[12], keys[13], keys[14], keys[15], out_planes),
    )
    if stride == 1 and in_planes != out_planes:
        tp["ws"] = 0.1 * jax.random.normal(
            keys[3], (out_planes, in_planes, 1, 1), jnp.float32)
        tp["bns"] = bn(keys[16], keys[17], keys[18], keys[19], out_planes)
    return tp


# ----------------------------------------------------------------------------- #
# Pure-JAX reference replicating the PyTorch forward (BN in eval mode).
# ----------------------------------------------------------------------------- #
def block_ref(x, tp, *, stride, in_planes, out_planes):
    def bn(y, g, b, m, v):
        sh = (1, -1, 1, 1)
        return (y - m.reshape(sh)) / jnp.sqrt(v + EPS).reshape(sh) \
            * g.reshape(sh) + b.reshape(sh)

    dn = ("NCHW", "OIHW", "NCHW")
    out = lax.conv_general_dilated(x, tp["w1"], (1, 1), "VALID",
                                   dimension_numbers=dn)
    out = jax.nn.relu(bn(out, *tp["bn1"]))
    P = tp["w2"].shape[0]
    out = lax.conv_general_dilated(out, tp["w2"], (stride, stride),
                                   ((1, 1), (1, 1)), dimension_numbers=dn,
                                   feature_group_count=P)
    out = jax.nn.relu(bn(out, *tp["bn2"]))
    out = lax.conv_general_dilated(out, tp["w3"], (1, 1), "VALID",
                                   dimension_numbers=dn)
    out = bn(out, *tp["bn3"])
    if stride == 1:
        if in_planes == out_planes:
            sc = x
        else:
            sc = lax.conv_general_dilated(x, tp["ws"], (1, 1), "VALID",
                                          dimension_numbers=dn)
            sc = bn(sc, *tp["bns"])
        out = out + sc
    return out


if __name__ == "__main__":
    key = jax.random.PRNGKey(0)
    N, H, W = 2, 8, 8
    configs = [
        dict(in_planes=8, out_planes=8,  expansion=4, stride=1),   # identity shortcut
        dict(in_planes=8, out_planes=16, expansion=4, stride=1),   # conv shortcut
        dict(in_planes=8, out_planes=16, expansion=4, stride=2),   # no shortcut
    ]

    for i, cfg in enumerate(configs):
        kx, kp = jax.random.split(jax.random.fold_in(key, i))
        x = jax.random.normal(kx, (N, cfg["in_planes"], H, W), jnp.float32)
        torch_params = make_params(kp, **cfg)
        kernel_params = prepare_block_params(torch_params)

        out = mobilenetv2_block(x, kernel_params, stride=cfg["stride"],
                                in_planes=cfg["in_planes"],
                                out_planes=cfg["out_planes"])
        out = jax.block_until_ready(out)

        ref = block_ref(x, torch_params, stride=cfg["stride"],
                        in_planes=cfg["in_planes"],
                        out_planes=cfg["out_planes"])
        ref = jax.block_until_ready(ref)

        assert out.shape == ref.shape, (cfg, out.shape, ref.shape)
        err = float(jnp.max(jnp.abs(out - ref)))
        assert err < 3e-4, (cfg, err)

    print("KERNEL_OK")
</pallas_src>

<mosaic_0001>
module attributes {stable_mosaic.version = 11 : i64} {
  func.func @_block_kernel(%arg0: i32, %arg1: memref<1x8x8x128xf32, #tpu.memory_space<vmem>>, %arg2: memref<128x128xf32, #tpu.memory_space<vmem>>, %arg3: memref<1x128xf32, #tpu.memory_space<vmem>>, %arg4: memref<3x3x128xf32, #tpu.memory_space<vmem>>, %arg5: memref<1x128xf32, #tpu.memory_space<vmem>>, %arg6: memref<128x128xf32, #tpu.memory_space<vmem>>, %arg7: memref<1x128xf32, #tpu.memory_space<vmem>>, %arg8: memref<1x8x8x128xf32, #tpu.memory_space<vmem>>, %arg9: memref<10x10x128xf32, #tpu.memory_space<vmem>>) attributes {dimension_semantics = [#tpu.dimension_semantics<parallel>], iteration_bounds = array<i64: 2>, scalar_prefetch = 0 : i64, scratch_operands = 1 : i64, tpu.core_type = #tpu.core_type<tc>, window_params = [{transform_indices = @transform_0, window_bounds = array<i64: 1, 8, 8, 128>}, {pipeline_mode = #tpu.pipeline_mode<synchronous>, transform_indices = @transform_1, window_bounds = array<i64: 128, 128>}, {pipeline_mode = #tpu.pipeline_mode<synchronous>, transform_indices = @transform_2, window_bounds = array<i64: 1, 128>}, {pipeline_mode = #tpu.pipeline_mode<synchronous>, transform_indices = @transform_3, window_bounds = array<i64: 3, 3, 128>}, {pipeline_mode = #tpu.pipeline_mode<synchronous>, transform_indices = @transform_4, window_bounds = array<i64: 1, 128>}, {pipeline_mode = #tpu.pipeline_mode<synchronous>, transform_indices = @transform_5, window_bounds = array<i64: 128, 128>}, {pipeline_mode = #tpu.pipeline_mode<synchronous>, transform_indices = @transform_6, window_bounds = array<i64: 1, 128>}, {transform_indices = @transform_7, window_bounds = array<i64: 1, 8, 8, 128>}]} {
    %c0 = arith.constant 0 : index
    %c0_0 = arith.constant 0 : index
    %c0_1 = arith.constant 0 : index
    %c0_2 = arith.constant 0 : index
    %0 = vector.load %arg1[%c0, %c0_0, %c0_1, %c0_2] : memref<1x8x8x128xf32, #tpu.memory_space<vmem>>, vector<1x8x8x128xf32>
    %1 = vector.shape_cast %0 : vector<1x8x8x128xf32> to vector<8x8x128xf32>
    %2 = vector.shape_cast %1 : vector<8x8x128xf32> to vector<64x128xf32>
    %c0_3 = arith.constant 0 : index
    %c0_4 = arith.constant 0 : index
    %3 = vector.load %arg2[%c0_3, %c0_4] : memref<128x128xf32, #tpu.memory_space<vmem>>, vector<128x128xf32>
    %cst = arith.constant dense<0.000000e+00> : vector<64x128xf32>
    %4 = tpu.matmul %2, %3, %cst {dimension_numbers = #tpu.dot_dimension_numbers<[1], [0], [0], [1], [0, 0, 1, 1], [], []>} : vector<64x128xf32>, vector<128x128xf32>, vector<64x128xf32> -> vector<64x128xf32>
    %c0_5 = arith.constant 0 : index
    %c0_6 = arith.constant 0 : index
    %5 = vector.load %arg3[%c0_5, %c0_6] : memref<1x128xf32, #tpu.memory_space<vmem>>, vector<1x128xf32>
    %6 = vector.broadcast %5 : vector<1x128xf32> to vector<64x128xf32>
    %7 = arith.addf %4, %6 : vector<64x128xf32>
    %cst_7 = arith.constant 0.000000e+00 : f32
    %8 = vector.broadcast %cst_7 : f32 to vector<64x128xf32>
    %9 = arith.maximumf %7, %8 : vector<64x128xf32>
    %cst_8 = arith.constant 0.000000e+00 : f32
    %10 = vector.broadcast %cst_8 : f32 to vector<1x10x128xf32>
    %cst_9 = arith.constant 0.000000e+00 : f32
    %11 = vector.broadcast %cst_9 : f32 to vector<8x1x128xf32>
    %c0_10 = arith.constant 0 : index
    %c0_11 = arith.constant 0 : index
    %c0_12 = arith.constant 0 : index
    %12 = vector.load %arg9[%c0_10, %c0_11, %c0_12] : memref<10x10x128xf32, #tpu.memory_space<vmem>>, vector<1x10x128xf32>
    tpu.vector_store %arg9[%c0_10, %c0_11, %c0_12], %10 {strides = array<i32>} : memref<10x10x128xf32, #tpu.memory_space<vmem>>, vector<1x10x128xf32>,
    %c9 = arith.constant 9 : index
    %c0_13 = arith.constant 0 : index
    %c0_14 = arith.constant 0 : index
    %13 = vector.load %arg9[%c9, %c0_13, %c0_14] : memref<10x10x128xf32, #tpu.memory_space<vmem>>, vector<1x10x128xf32>
    tpu.vector_store %arg9[%c9, %c0_13, %c0_14], %10 {strides = array<i32>} : memref<10x10x128xf32, #tpu.memory_space<vmem>>, vector<1x10x128xf32>,
    %c1 = arith.constant 1 : index
    %c0_15 = arith.constant 0 : index
    %c0_16 = arith.constant 0 : index
    %14 = vector.load %arg9[%c1, %c0_15, %c0_16] : memref<10x10x128xf32, #tpu.memory_space<vmem>>, vector<8x1x128xf32>
    tpu.vector_store %arg9[%c1, %c0_15, %c0_16], %11 {strides = array<i32>} : memref<10x10x128xf32, #tpu.memory_space<vmem>>, vector<8x1x128xf32>,
    %c1_17 = arith.constant 1 : index
    %c9_18 = arith.constant 9 : index
    %c0_19 = arith.constant 0 : index
    %15 = vector.load %arg9[%c1_17, %c9_18, %c0_19] : memref<10x10x128xf32, #tpu.memory_space<vmem>>, vector<8x1x128xf32>
    tpu.vector_store %arg9[%c1_17, %c9_18, %c0_19], %11 {strides = array<i32>} : memref<10x10x128xf32, #tpu.memory_space<vmem>>, vector<8x1x128xf32>,
    %16 = vector.shape_cast %9 : vector<64x128xf32> to vector<8x8x128xf32>
    %c1_20 = arith.constant 1 : index
    %c1_21 = arith.constant 1 : index
    %c0_22 = arith.constant 0 : index
    %17 = vector.load %arg9[%c1_20, %c1_21, %c0_22] : memref<10x10x128xf32, #tpu.memory_space<vmem>>, vector<8x8x128xf32>
    tpu.vector_store %arg9[%c1_20, %c1_21, %c0_22], %16 {strides = array<i32>} : memref<10x10x128xf32, #tpu.memory_space<vmem>>, vector<8x8x128xf32>,
    %cst_23 = arith.constant 0.000000e+00 : f32
    %18 = vector.broadcast %cst_23 : f32 to vector<8x8x128xf32>
    %c0_24 = arith.constant 0 : index
    %c0_25 = arith.constant 0 : index
    %c0_26 = arith.constant 0 : index
    %19 = vector.load %arg9[%c0_24, %c0_25, %c0_26] : memref<10x10x128xf32, #tpu.memory_space<vmem>>, vector<8x10x128xf32>
    %20 = vector.extract_strided_slice %19 {offsets = [0, 0, 0], sizes = [8, 8, 128], strides = [1, 1, 1]} : vector<8x10x128xf32> to vector<8x8x128xf32>
    %c0_27 = arith.constant 0 : index
    %c0_28 = arith.constant 0 : index
    %c0_29 = arith.constant 0 : index
    %21 = vector.load %arg4[%c0_27, %c0_28, %c0_29] : memref<3x3x128xf32, #tpu.memory_space<vmem>>, vector<1x1x128xf32>
    %22 = vector.shape_cast %21 : vector<1x1x128xf32> to vector<128xf32>
    %23 = vector.shape_cast %22 : vector<128xf32> to vector<1x1x128xf32>
    %24 = vector.broadcast %23 : vector<1x1x128xf32> to vector<8x8x128xf32>
    %25 = arith.mulf %20, %24 : vector<8x8x128xf32>
    %26 = arith.addf %18, %25 : vector<8x8x128xf32>
    %27 = vector.extract_strided_slice %19 {offsets = [0, 1, 0], sizes = [8, 8, 128], strides = [1, 1, 1]} : vector<8x10x128xf32> to vector<8x8x128xf32>
    %c0_30 = arith.constant 0 : index
    %c1_31 = arith.constant 1 : index
    %c0_32 = arith.constant 0 : index
    %28 = vector.load %arg4[%c0_30, %c1_31, %c0_32] : memref<3x3x128xf32, #tpu.memory_space<vmem>>, vector<1x1x128xf32>
    %29 = vector.shape_cast %28 : vector<1x1x128xf32> to vector<128xf32>
    %30 = vector.shape_cast %29 : vector<128xf32> to vector<1x1x128xf32>
    %31 = vector.broadcast %30 : vector<1x1x128xf32> to vector<8x8x128xf32>
    %32 = arith.mulf %27, %31 : vector<8x8x128xf32>
    %33 = arith.addf %26, %32 : vector<8x8x128xf32>
    %34 = vector.extract_strided_slice %19 {offsets = [0, 2, 0], sizes = [8, 8, 128], strides = [1, 1, 1]} : vector<8x10x128xf32> to vector<8x8x128xf32>
    %c0_33 = arith.constant 0 : index
    %c2 = arith.constant 2 : index
    %c0_34 = arith.constant 0 : index
    %35 = vector.load %arg4[%c0_33, %c2, %c0_34] : memref<3x3x128xf32, #tpu.memory_space<vmem>>, vector<1x1x128xf32>
    %36 = vector.shape_cast %35 : vector<1x1x128xf32> to vector<128xf32>
    %37 = vector.shape_cast %36 : vector<128xf32> to vector<1x1x128xf32>
    %38 = vector.broadcast %37 : vector<1x1x128xf32> to vector<8x8x128xf32>
    %39 = arith.mulf %34, %38 : vector<8x8x128xf32>
    %40 = arith.addf %33, %39 : vector<8x8x128xf32>
    %c1_35 = arith.constant 1 : index
    %c0_36 = arith.constant 0 : index
    %c0_37 = arith.constant 0 : index
    %41 = vector.load %arg9[%c1_35, %c0_36, %c0_37] : memref<10x10x128xf32, #tpu.memory_space<vmem>>, vector<8x10x128xf32>
    %42 = vector.extract_strided_slice %41 {offsets = [0, 0, 0], sizes = [8, 8, 128], strides = [1, 1, 1]} : vector<8x10x128xf32> to vector<8x8x128xf32>
    %c1_38 = arith.constant 1 : index
    %c0_39 = arith.constant 0 : index
    %c0_40 = arith.constant 0 : index
    %43 = vector.load %arg4[%c1_38, %c0_39, %c0_40] : memref<3x3x128xf32, #tpu.memory_space<vmem>>, vector<1x1x128xf32>
    %44 = vector.shape_cast %43 : vector<1x1x128xf32> to vector<128xf32>
    %45 = vector.shape_cast %44 : vector<128xf32> to vector<1x1x128xf32>
    %46 = vector.broadcast %45 : vector<1x1x128xf32> to vector<8x8x128xf32>
    %47 = arith.mulf %42, %46 : vector<8x8x128xf32>
    %48 = arith.addf %40, %47 : vector<8x8x128xf32>
    %49 = vector.extract_strided_slice %41 {offsets = [0, 1, 0], sizes = [8, 8, 128], strides = [1, 1, 1]} : vector<8x10x128xf32> to vector<8x8x128xf32>
    %c1_41 = arith.constant 1 : index
    %c1_42 = arith.constant 1 : index
    %c0_43 = arith.constant 0 : index
    %50 = vector.load %arg4[%c1_41, %c1_42, %c0_43] : memref<3x3x128xf32, #tpu.memory_space<vmem>>, vector<1x1x128xf32>
    %51 = vector.shape_cast %50 : vector<1x1x128xf32> to vector<128xf32>
    %52 = vector.shape_cast %51 : vector<128xf32> to vector<1x1x128xf32>
    %53 = vector.broadcast %52 : vector<1x1x128xf32> to vector<8x8x128xf32>
    %54 = arith.mulf %49, %53 : vector<8x8x128xf32>
    %55 = arith.addf %48, %54 : vector<8x8x128xf32>
    %56 = vector.extract_strided_slice %41 {offsets = [0, 2, 0], sizes = [8, 8, 128], strides = [1, 1, 1]} : vector<8x10x128xf32> to vector<8x8x128xf32>
    %c1_44 = arith.constant 1 : index
    %c2_45 = arith.constant 2 : index
    %c0_46 = arith.constant 0 : index
    %57 = vector.load %arg4[%c1_44, %c2_45, %c0_46] : memref<3x3x128xf32, #tpu.memory_space<vmem>>, vector<1x1x128xf32>
    %58 = vector.shape_cast %57 : vector<1x1x128xf32> to vector<128xf32>
    %59 = vector.shape_cast %58 : vector<128xf32> to vector<1x1x128xf32>
    %60 = vector.broadcast %59 : vector<1x1x128xf32> to vector<8x8x128xf32>
    %61 = arith.mulf %56, %60 : vector<8x8x128xf32>
    %62 = arith.addf %55, %61 : vector<8x8x128xf32>
    %c2_47 = arith.constant 2 : index
    %c0_48 = arith.constant 0 : index
    %c0_49 = arith.constant 0 : index
    %63 = vector.load %arg9[%c2_47, %c0_48, %c0_49] : memref<10x10x128xf32, #tpu.memory_space<vmem>>, vector<8x10x128xf32>
    %64 = vector.extract_strided_slice %63 {offsets = [0, 0, 0], sizes = [8, 8, 128], strides = [1, 1, 1]} : vector<8x10x128xf32> to vector<8x8x128xf32>
    %c2_50 = arith.constant 2 : index
    %c0_51 = arith.constant 0 : index
    %c0_52 = arith.constant 0 : index
    %65 = vector.load %arg4[%c2_50, %c0_51, %c0_52] : memref<3x3x128xf32, #tpu.memory_space<vmem>>, vector<1x1x128xf32>
    %66 = vector.shape_cast %65 : vector<1x1x128xf32> to vector<128xf32>
    %67 = vector.shape_cast %66 : vector<128xf32> to vector<1x1x128xf32>
    %68 = vector.broadcast %67 : vector<1x1x128xf32> to vector<8x8x128xf32>
    %69 = arith.mulf %64, %68 : vector<8x8x128xf32>
    %70 = arith.addf %62, %69 : vector<8x8x128xf32>
    %71 = vector.extract_strided_slice %63 {offsets = [0, 1, 0], sizes = [8, 8, 128], strides = [1, 1, 1]} : vector<8x10x128xf32> to vector<8x8x128xf32>
    %c2_53 = arith.constant 2 : index
    %c1_54 = arith.constant 1 : index
    %c0_55 = arith.constant 0 : index
    %72 = vector.load %arg4[%c2_53, %c1_54, %c0_55] : memref<3x3x128xf32, #tpu.memory_space<vmem>>, vector<1x1x128xf32>
    %73 = vector.shape_cast %72 : vector<1x1x128xf32> to vector<128xf32>
    %74 = vector.shape_cast %73 : vector<128xf32> to vector<1x1x128xf32>
    %75 = vector.broadcast %74 : vector<1x1x128xf32> to vector<8x8x128xf32>
    %76 = arith.mulf %71, %75 : vector<8x8x128xf32>
    %77 = arith.addf %70, %76 : vector<8x8x128xf32>
    %78 = vector.extract_strided_slice %63 {offsets = [0, 2, 0], sizes = [8, 8, 128], strides = [1, 1, 1]} : vector<8x10x128xf32> to vector<8x8x128xf32>
    %c2_56 = arith.constant 2 : index
    %c2_57 = arith.constant 2 : index
    %c0_58 = arith.constant 0 : index
    %79 = vector.load %arg4[%c2_56, %c2_57, %c0_58] : memref<3x3x128xf32, #tpu.memory_space<vmem>>, vector<1x1x128xf32>
    %80 = vector.shape_cast %79 : vector<1x1x128xf32> to vector<128xf32>
    %81 = vector.shape_cast %80 : vector<128xf32> to vector<1x1x128xf32>
    %82 = vector.broadcast %81 : vector<1x1x128xf32> to vector<8x8x128xf32>
    %83 = arith.mulf %78, %82 : vector<8x8x128xf32>
    %84 = arith.addf %77, %83 : vector<8x8x128xf32>
    %c0_59 = arith.constant 0 : index
    %c0_60 = arith.constant 0 : index
    %85 = vector.load %arg5[%c0_59, %c0_60] : memref<1x128xf32, #tpu.memory_space<vmem>>, vector<1x128xf32>
    %86 = vector.shape_cast %85 : vector<1x128xf32> to vector<1x1x128xf32>
    %87 = vector.broadcast %86 : vector<1x1x128xf32> to vector<8x8x128xf32>
    %88 = arith.addf %84, %87 : vector<8x8x128xf32>
    %cst_61 = arith.constant 0.000000e+00 : f32
    %89 = vector.broadcast %cst_61 : f32 to vector<8x8x128xf32>
    %90 = arith.maximumf %88, %89 : vector<8x8x128xf32>
    %91 = vector.shape_cast %90 : vector<8x8x128xf32> to vector<64x128xf32>
    %c0_62 = arith.constant 0 : index
    %c0_63 = arith.constant 0 : index
    %92 = vector.load %arg6[%c0_62, %c0_63] : memref<128x128xf32, #tpu.memory_space<vmem>>, vector<128x128xf32>
    %cst_64 = arith.constant dense<0.000000e+00> : vector<64x128xf32>
    %93 = tpu.matmul %91, %92, %cst_64 {dimension_numbers = #tpu.dot_dimension_numbers<[1], [0], [0], [1], [0, 0, 1, 1], [], []>} : vector<64x128xf32>, vector<128x128xf32>, vector<64x128xf32> -> vector<64x128xf32>
    %c0_65 = arith.constant 0 : index
    %c0_66 = arith.constant 0 : index
    %94 = vector.load %arg7[%c0_65, %c0_66] : memref<1x128xf32, #tpu.memory_space<vmem>>, vector<1x128xf32>
    %95 = vector.broadcast %94 : vector<1x128xf32> to vector<64x128xf32>
    %96 = arith.addf %93, %95 : vector<64x128xf32>
    %97 = arith.addf %96, %2 : vector<64x128xf32>
    %98 = vector.shape_cast %97 : vector<64x128xf32> to vector<8x8x128xf32>
    %c0_67 = arith.constant 0 : index
    %c0_68 = arith.constant 0 : index
    %c0_69 = arith.constant 0 : index
    %c0_70 = arith.constant 0 : index
    %99 = vector.load %arg8[%c0_67, %c0_68, %c0_69, %c0_70] : memref<1x8x8x128xf32, #tpu.memory_space<vmem>>, vector<1x8x8x128xf32>
    %100 = vector.shape_cast %99 : vector<1x8x8x128xf32> to vector<8x8x128xf32>
    %101 = vector.shape_cast %98 : vector<8x8x128xf32> to vector<1x8x8x128xf32>
    tpu.vector_store %arg8[%c0_67, %c0_68, %c0_69, %c0_70], %101 {strides = array<i32>} : memref<1x8x8x128xf32, #tpu.memory_space<vmem>>, vector<1x8x8x128xf32>,
    return
  }
  func.func @transform_0(%arg0: i32) -> (i32, i32, i32, i32) {
    %c0_i32 = arith.constant 0 : i32
    %c0_i32_0 = arith.constant 0 : i32
    %c0_i32_1 = arith.constant 0 : i32
    %c0_i32_2 = arith.constant 0 : i32
    return %arg0, %c0_i32, %c0_i32_0, %c0_i32_1 : i32, i32, i32, i32
  }
  func.func @transform_1(%arg0: i32) -> (i32, i32) {
    %c0_i32 = arith.constant 0 : i32
    %c0_i32_0 = arith.constant 0 : i32
    %c0_i32_1 = arith.constant 0 : i32
    return %c0_i32, %c0_i32_0 : i32, i32
  }
  func.func @transform_2(%arg0: i32) -> (i32, i32) {
    %c0_i32 = arith.constant 0 : i32
    %c0_i32_0 = arith.constant 0 : i32
    %c0_i32_1 = arith.constant 0 : i32
    return %c0_i32, %c0_i32_0 : i32, i32
  }
  func.func @transform_3(%arg0: i32) -> (i32, i32, i32) {
    %c0_i32 = arith.constant 0 : i32
    %c0_i32_0 = arith.constant 0 : i32
    %c0_i32_1 = arith.constant 0 : i32
    %c0_i32_2 = arith.constant 0 : i32
    return %c0_i32, %c0_i32_0, %c0_i32_1 : i32, i32, i32
  }
  func.func @transform_4(%arg0: i32) -> (i32, i32) {
    %c0_i32 = arith.constant 0 : i32
    %c0_i32_0 = arith.constant 0 : i32
    %c0_i32_1 = arith.constant 0 : i32
    return %c0_i32, %c0_i32_0 : i32, i32
  }
  func.func @transform_5(%arg0: i32) -> (i32, i32) {
    %c0_i32 = arith.constant 0 : i32
    %c0_i32_0 = arith.constant 0 : i32
    %c0_i32_1 = arith.constant 0 : i32
    return %c0_i32, %c0_i32_0 : i32, i32
  }
  func.func @transform_6(%arg0: i32) -> (i32, i32) {
    %c0_i32 = arith.constant 0 : i32
    %c0_i32_0 = arith.constant 0 : i32
    %c0_i32_1 = arith.constant 0 : i32
    return %c0_i32, %c0_i32_0 : i32, i32
  }
  func.func @transform_7(%arg0: i32) -> (i32, i32, i32, i32) {
    %c0_i32 = arith.constant 0 : i32
    %c0_i32_0 = arith.constant 0 : i32
    %c0_i32_1 = arith.constant 0 : i32
    %c0_i32_2 = arith.constant 0 : i32
    return %arg0, %c0_i32, %c0_i32_0, %c0_i32_1 : i32, i32, i32, i32
  }
}

</mosaic_0001>

<llo_original>
// kernel: tpu_custom_call.1
$region0: #{tpu_custom_call.1}
  #allocation0 [shape = 'u32[]', space=smem, size = 0x4, offset = 0x4, fixed_abs, tag = 'smem constant byte address 0x4 - core index']
  #allocation1 [shape = 'u32[72,128]{1,0:T(1,128)}', space=vmem, size = 0x9000, scoped, tag = 'internal scratch']
  #allocation2 [shape = 'f32[10,10,128]{2,1,0:T(8,128)}', space=vmem, size = 0x14000, scoped, tag = 'scratch operand']
  %s0 = inlined_call_operand.hbm [shape: f32[2,8,8,128], index: 0, kind: input, shape index: {}]
  %s1 = inlined_call_operand.hbm [shape: f32[128,128], index: 1, kind: input, shape index: {}]
  %s2 = inlined_call_operand.vmem [shape: f32[1,128], index: 2, kind: input, shape index: {}]
  %s3 = inlined_call_operand.hbm [shape: f32[3,3,128], index: 3, kind: input, shape index: {}]
  %s4 = inlined_call_operand.vmem [shape: f32[1,128], index: 4, kind: input, shape index: {}]
  %s5 = inlined_call_operand.hbm [shape: f32[128,128], index: 5, kind: input, shape index: {}]
  %s6 = inlined_call_operand.vmem [shape: f32[1,128], index: 6, kind: input, shape index: {}]
  %s7 = inlined_call_operand.hbm [shape: f32[2,8,8,128], index: 7, kind: output, shape index: {}]
  %s8 = sld [smem:[#allocation0]]
  $region77: #{tpu_custom_call.1} parent=0
    _
  %s10 = ssub.s32 1, %s8
  %s11 = scalar_select 0, %s10, %s8
  $region1: #{tpu_custom_call.1} parent=0
    #allocation3 [shape = 'u8[65536]{0}', space=vmem, size = 0x10000, scoped, tag = 'input window, operand 0']
    #allocation4 [shape = 's32[2]{0}', space=sflag, size = 0x8, scoped, tag = 'scoped memory for tpu_custom_call.1']
    #allocation5 [shape = 's32[2]{0}', space=sflag, size = 0x8, scoped, tag = 'scoped memory for tpu_custom_call.1']
    #allocation6 [shape = 'u8[65536]{0}', space=vmem, size = 0x10000, scoped, tag = 'input window, operand 1, single buffered']
    #allocation7 [shape = 's32[1]{0}', space=sflag, size = 0x4, scoped, tag = 'scoped memory for tpu_custom_call.1']
    #allocation8 [shape = 'u8[6144]{0}', space=vmem, size = 0x1800, scoped, tag = 'input window, operand 3, single buffered']
    #allocation9 [shape = 'u8[65536]{0}', space=vmem, size = 0x10000, scoped, tag = 'input window, operand 5, single buffered']
    #allocation10 [shape = 's32[1]{0}', space=sflag, size = 0x4, scoped, tag = 'scoped memory for tpu_custom_call.1']
    #allocation11 [shape = 'u8[65536]{0}', space=vmem, size = 0x10000, scoped, tag = 'output window, operand 0']
    %12 = vsyncpa [#allocation4], 0
    %s13 = scalar_lea.sflag [#allocation4], 1
    %14 = vsyncpa %s13, 0
    %15 = vsyncpa [#allocation7], 0
    %16 = vsyncpa [#allocation10], 0
    %17 = vsyncpa [#allocation5], 0
    %s18 = scalar_lea.sflag [#allocation5], 1
    %19 = vsyncpa %s18, 0
    loop: start=0, step=1, limit=4
    $region2: #{tpu_custom_call.1} parent=1 // loop_pre_header
      _
    $region3: #{tpu_custom_call.1} parent=1 // loop_header
      %s21 = sphi 0, %s25
      %p22 = scmp.ge.s32.totalorder %s21, 4
      %s31 = sphi 0, %s33
      %s34 = sphi 0, %s31
      %s35 = sphi 0, %s34
      %s51 = sphi 0, %s35
      %s55 = sphi 0, %s55
      %s57 = sphi 0, %s55
      %s58 = sphi 0, %s57
      %s72 = sphi 0, %s58
      %s76 = sphi 0, %s76
      %s78 = sphi 0, %s76
      %s79 = sphi 0, %s78
      %s93 = sphi 0, %s79
      %s97 = sphi 0, %s97
      %s99 = sphi 0, %s97
      %s100 = sphi 0, %s99
      %s114 = sphi 0, %s100
      %s118 = sphi 0, %s118
      %s120 = sphi 0, %s118
      %s121 = sphi 0, %s120
      %s135 = sphi 0, %s121
      %s139 = sphi 0, %s139
      %s141 = sphi 0, %s139
      %s142 = sphi 0, %s141
      %s156 = sphi 0, %s142
      %s160 = sphi 0, %s160
      %s162 = sphi 0, %s160
      %s163 = sphi 0, %s162
      %s177 = sphi 0, %s163
      %s183 = sphi 0, %s185
      %s186 = sphi 0, %s183
      %s187 = sphi 0, %s186
      %s203 = sphi 0, %s187
    $region4: #{tpu_custom_call.1} parent=1 // loop_header_branch
      %24 = sbr.rel (%p22) target = $region8
    $region5: #{tpu_custom_call.1} parent=1 // loop_body
      %s26 = ssub.s32 %s21, 1
      %s27 = ssub.s32 %s21, 2
      %s28 = sadd.s32 %s21, 1
      %s29 = ssub.s32 %s21, %s28
      %p30 = scmp.eq.s32.totalorder %s29, 0
      %s32 = sadd.s32 %s31, 1
      %s33 = scalar_select %p30, %s31, %s32
      %p36 = pneg %p30
      %p37 = scmp.eq.s32.totalorder %s21, 1
      %p38 = por %p36, %p37
      %p39 = scmp.ne.s32.totalorder %s31, %s34
      %p40 = scmp.eq.s32.totalorder %s21, 0
      %p41 = por %p39, %p40
      %p42 = scmp.ne.s32.totalorder %s31, %s34
      %p43 = scmp.eq.s32.totalorder %s26, 1
      %p44 = por %p42, %p43
      %p45 = scmp.ne.s32.totalorder %s34, %s35
      %p46 = scmp.eq.s32.totalorder %s26, 0
      %p47 = por %p45, %p46
      %p48 = scmp.ne.s32.totalorder %s34, %s35
      %p49 = scmp.eq.s32.totalorder %s27, 1
      %p50 = por %p48, %p49
      %p52 = scmp.ne.s32.totalorder %s35, %s51
      %p53 = scmp.eq.s32.totalorder %s27, 0
      %p54 = por %p52, %p53
      %s56 = sadd.s32 %s55, 1
      %p59 = scmp.eq.s32.totalorder %s21, 1
      %p60 = scmp.ne.s32.totalorder %s55, %s57
      %p61 = scmp.eq.s32.totalorder %s21, 0
      %p62 = por %p60, %p61
      %p63 = scmp.ne.s32.totalorder %s55, %s57
      %p64 = scmp.eq.s32.totalorder %s26, 1
      %p65 = por %p63, %p64
      %p66 = scmp.ne.s32.totalorder %s57, %s58
      %p67 = scmp.eq.s32.totalorder %s26, 0
      %p68 = por %p66, %p67
      %p69 = scmp.ne.s32.totalorder %s57, %s58
      %p70 = scmp.eq.s32.totalorder %s27, 1
      %p71 = por %p69, %p70
      %p73 = scmp.ne.s32.totalorder %s58, %s72
      %p74 = scmp.eq.s32.totalorder %s27, 0
      %p75 = por %p73, %p74
      %s77 = sadd.s32 %s76, 1
      %p80 = scmp.eq.s32.totalorder %s21, 1
      %p81 = scmp.ne.s32.totalorder %s76, %s78
      %p82 = scmp.eq.s32.totalorder %s21, 0
      %p83 = por %p81, %p82
      %p84 = scmp.ne.s32.totalorder %s76, %s78
      %p85 = scmp.eq.s32.totalorder %s26, 1
      %p86 = por %p84, %p85
      %p87 = scmp.ne.s32.totalorder %s78, %s79
      %p88 = scmp.eq.s32.totalorder %s26, 0
      %p89 = por %p87, %p88
      %p90 = scmp.ne.s32.totalorder %s78, %s79
      %p91 = scmp.eq.s32.totalorder %s27, 1
      %p92 = por %p90, %p91
      %p94 = scmp.ne.s32.totalorder %s79, %s93
      %p95 = scmp.eq.s32.totalorder %s27, 0
      %p96 = por %p94, %p95
      %s98 = sadd.s32 %s97, 1
      %p101 = scmp.eq.s32.totalorder %s21, 1
      %p102 = scmp.ne.s32.totalorder %s97, %s99
      %p103 = scmp.eq.s32.totalorder %s21, 0
      %p104 = por %p102, %p103
      %p105 = scmp.ne.s32.totalorder %s97, %s99
      %p106 = scmp.eq.s32.totalorder %s26, 1
      %p107 = por %p105, %p106
      %p108 = scmp.ne.s32.totalorder %s99, %s100
      %p109 = scmp.eq.s32.totalorder %s26, 0
      %p110 = por %p108, %p109
      %p111 = scmp.ne.s32.totalorder %s99, %s100
      %p112 = scmp.eq.s32.totalorder %s27, 1
      %p113 = por %p111, %p112
      %p115 = scmp.ne.s32.totalorder %s100, %s114
      %p116 = scmp.eq.s32.totalorder %s27, 0
      %p117 = por %p115, %p116
      %s119 = sadd.s32 %s118, 1
      %p122 = scmp.eq.s32.totalorder %s21, 1
      %p123 = scmp.ne.s32.totalorder %s118, %s120
      %p124 = scmp.eq.s32.totalorder %s21, 0
      %p125 = por %p123, %p124
      %p126 = scmp.ne.s32.totalorder %s118, %s120
      %p127 = scmp.eq.s32.totalorder %s26, 1
      %p128 = por %p126, %p127
      %p129 = scmp.ne.s32.totalorder %s120, %s121
      %p130 = scmp.eq.s32.totalorder %s26, 0
      %p131 = por %p129, %p130
      %p132 = scmp.ne.s32.totalorder %s120, %s121
      %p133 = scmp.eq.s32.totalorder %s27, 1
      %p134 = por %p132, %p133
      %p136 = scmp.ne.s32.totalorder %s121, %s135
      %p137 = scmp.eq.s32.totalorder %s27, 0
      %p138 = por %p136, %p137
      %s140 = sadd.s32 %s139, 1
      %p143 = scmp.eq.s32.totalorder %s21, 1
      %p144 = scmp.ne.s32.totalorder %s139, %s141
      %p145 = scmp.eq.s32.totalorder %s21, 0
      %p146 = por %p144, %p145
      %p147 = scmp.ne.s32.totalorder %s139, %s141
      %p148 = scmp.eq.s32.totalorder %s26, 1
      %p149 = por %p147, %p148
      %p150 = scmp.ne.s32.totalorder %s141, %s142
      %p151 = scmp.eq.s32.totalorder %s26, 0
      %p152 = por %p150, %p151
      %p153 = scmp.ne.s32.totalorder %s141, %s142
      %p154 = scmp.eq.s32.totalorder %s27, 1
      %p155 = por %p153, %p154
      %p157 = scmp.ne.s32.totalorder %s142, %s156
      %p158 = scmp.eq.s32.totalorder %s27, 0
      %p159 = por %p157, %p158
      %s161 = sadd.s32 %s160, 1
      %p164 = scmp.eq.s32.totalorder %s21, 1
      %p165 = scmp.ne.s32.totalorder %s160, %s162
      %p166 = scmp.eq.s32.totalorder %s21, 0
      %p167 = por %p165, %p166
      %p168 = scmp.ne.s32.totalorder %s160, %s162
      %p169 = scmp.eq.s32.totalorder %s26, 1
      %p170 = por %p168, %p169
      %p171 = scmp.ne.s32.totalorder %s162, %s163
      %p172 = scmp.eq.s32.totalorder %s26, 0
      %p173 = por %p171, %p172
      %p174 = scmp.ne.s32.totalorder %s162, %s163
      %p175 = scmp.eq.s32.totalorder %s27, 1
      %p176 = por %p174, %p175
      %p178 = scmp.ne.s32.totalorder %s163, %s177
      %p179 = scmp.eq.s32.totalorder %s27, 0
      %p180 = por %p178, %p179
      %s181 = ssub.s32 %s21, %s28
      %p182 = scmp.eq.s32.totalorder %s181, 0
      %s184 = sadd.s32 %s183, 1
      %s185 = scalar_select %p182, %s183, %s184
      %p188 = pneg %p182
      %p189 = scmp.eq.s32.totalorder %s21, 1
      %p190 = por %p188, %p189
      %p191 = scmp.ne.s32.totalorder %s183, %s186
      %p192 = scmp.eq.s32.totalorder %s21, 0
      %p193 = por %p191, %p192
      %p194 = scmp.ne.s32.totalorder %s183, %s186
      %p195 = scmp.eq.s32.totalorder %s26, 1
      %p196 = por %p194, %p195
      %p197 = scmp.ne.s32.totalorder %s186, %s187
      %p198 = scmp.eq.s32.totalorder %s26, 0
      %p199 = por %p197, %p198
      %p200 = scmp.ne.s32.totalorder %s186, %s187
      %p201 = scmp.eq.s32.totalorder %s27, 1
      %p202 = por %p200, %p201
      %p204 = scmp.ne.s32.totalorder %s187, %s203
      %p205 = scmp.eq.s32.totalorder %s27, 0
      %p206 = por %p204, %p205
      %p207 = scmp.le.s32.totalorder 1, %s21
      %p208 = scmp.lt.s32.totalorder %s21, 3
      %p209 = pnand %p207, %p208
      %p210 = pneg %p209
      // Predicated region
      $region9: #{tpu_custom_call.1} parent=5 // pred_check
        _
      $region10: #{tpu_custom_call.1} parent=5 // pred_check_branch
        %212 = sbr.rel (%p209) target = $region12
      $region11: #{tpu_custom_call.1} parent=5 // pred_region
        %s213 = ssub.s32 %s21, 1
        // Predicated region
        $region13: #{tpu_custom_call.1} parent=11 // pred_check
          %p214 = pneg %p68
        $region14: #{tpu_custom_call.1} parent=11 // pred_check_branch
          %216 = sbr.rel (%p214) target = $region16
        $region15: #{tpu_custom_call.1} parent=11 // pred_region
          %218 = vsyncadd [#allocation7], 0
          %s219 = sshll.u32 %s1, 4
          %s220 = int_to_ptr.hbm [resolvable:$true] %s219
          %s221 = sshll.u32 [#allocation6], 4
          %s222 = int_to_ptr.vmem [resolvable:$true] %s221
          %227 = dma.hbm_to_vmem [thread:$0]  %s220, 2048, %s222, [#allocation7], 128, 128, 8
        $region16: #{tpu_custom_call.1} parent=11 // pred_fallthru
          _
        // Predicated region
        $region17: #{tpu_custom_call.1} parent=11 // pred_check
          %p228 = pneg %p89
        $region18: #{tpu_custom_call.1} parent=11 // pred_check_branch
          %230 = sbr.rel (%p228) target = $region20
        $region19: #{tpu_custom_call.1} parent=11 // pred_region
          _
        $region20: #{tpu_custom_call.1} parent=11 // pred_fallthru
          _
        // Predicated region
        $region21: #{tpu_custom_call.1} parent=11 // pred_check
          %p231 = pneg %p110
        $region22: #{tpu_custom_call.1} parent=11 // pred_check_branch
          %233 = sbr.rel (%p231) target = $region24
        $region23: #{tpu_custom_call.1} parent=11 // pred_region
          %235 = vsyncadd [#allocation7], 0
          %s236 = sshll.u32 %s3, 4
          %s237 = int_to_ptr.hbm [resolvable:$true] %s236
          %s238 = sshll.u32 [#allocation8], 4
          %s239 = int_to_ptr.vmem [resolvable:$true] %s238
          %244 = dma.hbm_to_vmem [thread:$0]  %s237, 192, %s239, [#allocation7], 64, 64, 4
        $region24: #{tpu_custom_call.1} parent=11 // pred_fallthru
          _
        // Predicated region
        $region25: #{tpu_custom_call.1} parent=11 // pred_check
          %p245 = pneg %p131
        $region26: #{tpu_custom_call.1} parent=11 // pred_check_branch
          %247 = sbr.rel (%p245) target = $region28
        $region27: #{tpu_custom_call.1} parent=11 // pred_region
          _
        $region28: #{tpu_custom_call.1} parent=11 // pred_fallthru
          _
        // Predicated region
        $region29: #{tpu_custom_call.1} parent=11 // pred_check
          %p248 = pneg %p152
        $region30: #{tpu_custom_call.1} parent=11 // pred_check_branch
          %250 = sbr.rel (%p248) target = $region32
        $region31: #{tpu_custom_call.1} parent=11 // pred_region
          %252 = vsyncadd [#allocation10], 0
          %s253 = sshll.u32 %s5, 4
          %s254 = int_to_ptr.hbm [resolvable:$true] %s253
          %s255 = sshll.u32 [#allocation9], 4
          %s256 = int_to_ptr.vmem [resolvable:$true] %s255
          %261 = dma.hbm_to_vmem [thread:$0]  %s254, 2048, %s256, [#allocation10], 128, 128, 8
        $region32: #{tpu_custom_call.1} parent=11 // pred_fallthru
          _
        // Predicated region
        $region33: #{tpu_custom_call.1} parent=11 // pred_check
          %p262 = pneg %p173
        $region34: #{tpu_custom_call.1} parent=11 // pred_check_branch
          %264 = sbr.rel (%p262) target = $region36
        $region35: #{tpu_custom_call.1} parent=11 // pred_region
          _
        $region36: #{tpu_custom_call.1} parent=11 // pred_fallthru
          _
      $region12: #{tpu_custom_call.1} parent=5 // pred_fallthru
        _
      %p265 = scmp.lt.s32.totalorder %s21, 2
      // Predicated region
      $region37: #{tpu_custom_call.1} parent=5 // pred_check
        %p266 = pneg %p265
      $region38: #{tpu_custom_call.1} parent=5 // pred_check_branch
        %268 = sbr.rel (%p266) target = $region40
      $region39: #{tpu_custom_call.1} parent=5 // pred_region
        // Predicated region
        $region41: #{tpu_custom_call.1} parent=39 // pred_check
          %p269 = pneg %p41
        $region42: #{tpu_custom_call.1} parent=39 // pred_check_branch
          %271 = sbr.rel (%p269) target = $region44
        $region43: #{tpu_custom_call.1} parent=39 // pred_region
          %s272 = sand.u32 %s31, 1
          %s273 = scalar_lea.sflag [#allocation4], %s272
          %s274 = sand.u32 %s31, 1
          %s275 = smul.addr %s274, 64
          %s276 = scalar_lea.vmem [#allocation3], %s275
          %278 = vsyncadd %s273, 0
          %s279 = smul.addr %s21, 8
          %s280 = smul.addr %s279, 8
          %s281 = scalar_lea.hbm %s0, %s280
          %s282 = sshll.u32 %s281, 4
          %s283 = int_to_ptr.hbm [resolvable:$true] %s282
          %s284 = sshll.u32 %s276, 4
          %s285 = int_to_ptr.vmem [resolvable:$true] %s284
          %290 = dma.hbm_to_vmem [thread:$0]  %s283, 1024, %s285, %s273, 128, 128, 8
        $region44: #{tpu_custom_call.1} parent=39 // pred_fallthru
          _
      $region40: #{tpu_custom_call.1} parent=5 // pred_fallthru
        _
      %p291 = scmp.le.s32.totalorder 1, %s21
      %p292 = scmp.lt.s32.totalorder %s21, 3
      %p293 = pnand %p291, %p292
      %p294 = pneg %p293
      // Predicated region
      $region45: #{tpu_custom_call.1} parent=5 // pred_check
        _
      $region46: #{tpu_custom_call.1} parent=5 // pred_check_branch
        %296 = sbr.rel (%p293) target = $region48
      $region47: #{tpu_custom_call.1} parent=5 // pred_region
        %s297 = ssub.s32 %s21, 1
        %s298 = sand.u32 %s34, 1
        %s299 = scalar_lea.sflag [#allocation4], %s298
        %s300 = sand.u32 %s34, 1
        %s301 = smul.addr %s300, 64
        %s302 = scalar_lea.vmem [#allocation3], %s301
        // Predicated region
        $region49: #{tpu_custom_call.1} parent=47 // pred_check
          %p303 = pneg %p47
        $region50: #{tpu_custom_call.1} parent=47 // pred_check_branch
          %305 = sbr.rel (%p303) target = $region52
        $region51: #{tpu_custom_call.1} parent=47 // pred_region
          %307 = dma.done %s299, 1024
        $region52: #{tpu_custom_call.1} parent=47 // pred_fallthru
          _
        // Predicated region
        $region53: #{tpu_custom_call.1} parent=47 // pred_check
          %p308 = pneg %p68
        $region54: #{tpu_custom_call.1} parent=47 // pred_check_branch
          %310 = sbr.rel (%p308) target = $region56
        $region55: #{tpu_custom_call.1} parent=47 // pred_region
          %312 = dma.done [#allocation7], 2048
        $region56: #{tpu_custom_call.1} parent=47 // pred_fallthru
          _
        // Predicated region
        $region57: #{tpu_custom_call.1} parent=47 // pred_check
          %p313 = pneg %p110
        $region58: #{tpu_custom_call.1} parent=47 // pred_check_branch
          %315 = sbr.rel (%p313) target = $region60
        $region59: #{tpu_custom_call.1} parent=47 // pred_region
          %317 = dma.done [#allocation7], 192
        $region60: #{tpu_custom_call.1} parent=47 // pred_fallthru
          _
        // Predicated region
        $region61: #{tpu_custom_call.1} parent=47 // pred_check
          %p318 = pneg %p152
        $region62: #{tpu_custom_call.1} parent=47 // pred_check_branch
          %320 = sbr.rel (%p318) target = $region64
        $region63: #{tpu_custom_call.1} parent=47 // pred_region
          %322 = dma.done [#allocation10], 2048
        $region64: #{tpu_custom_call.1} parent=47 // pred_fallthru
          _
        %s323 = sand.u32 %s34, 1
        %s324 = scalar_lea.sflag [#allocation4], %s323
        %s325 = sand.u32 %s34, 1
        %s326 = smul.addr %s325, 64
        %s327 = scalar_lea.vmem [#allocation3], %s326
        %p328 = pneg %p47
        %p329 = pneg %p44
        %p330 = pneg %p68
        %p331 = pneg %p65
        %p332 = pneg %p89
        %p333 = pneg %p86
        %p334 = pneg %p110
        %p335 = pneg %p107
        %p336 = pneg %p131
        %p337 = pneg %p128
        %p338 = pneg %p152
        %p339 = pneg %p149
        %p340 = pneg %p173
        %p341 = pneg %p170
        %p342 = pneg %p199
        %p343 = pneg %p196
        %s344 = sand.u32 %s186, 1
        %s345 = scalar_lea.sflag [#allocation5], %s344
        %s346 = sand.u32 %s186, 1
        %s347 = smul.addr %s346, 64
        %s348 = scalar_lea.vmem [#allocation11], %s347
        %v349 = vld [vmem:[%s302] sm:$0xff]
        %v350 = vld [vmem:[%s302 + $0x8] sm:$0xff]
        %v351 = vld [vmem:[%s302 + $0x10] sm:$0xff]
        %v352 = vld [vmem:[%s302 + $0x18] sm:$0xff]
        %v353 = vld [vmem:[%s302 + $0x20] sm:$0xff]
        %v354 = vld [vmem:[%s302 + $0x28] sm:$0xff]
        %v355 = vld [vmem:[%s302 + $0x30] sm:$0xff]
        %v356 = vld [vmem:[%s302 + $0x38] sm:$0xff]
        %v357 = vld [vmem:[#allocation6] sm:$0xff]
        %v358 = vld [vmem:[#allocation6 + $0x8] sm:$0xff]
        %v359 = vld [vmem:[#allocation6 + $0x10] sm:$0xff]
        %v360 = vld [vmem:[#allocation6 + $0x18] sm:$0xff]
        %v361 = vld [vmem:[#allocation6 + $0x20] sm:$0xff]
        %v362 = vld [vmem:[#allocation6 + $0x28] sm:$0xff]
        %v363 = vld [vmem:[#allocation6 + $0x30] sm:$0xff]
        %v364 = vld [vmem:[#allocation6 + $0x38] sm:$0xff]
        %v365 = vld [vmem:[#allocation6 + $0x40] sm:$0xff]
        %v366 = vld [vmem:[#allocation6 + $0x48] sm:$0xff]
        %v367 = vld [vmem:[#allocation6 + $0x50] sm:$0xff]
        %v368 = vld [vmem:[#allocation6 + $0x58] sm:$0xff]
        %v369 = vld [vmem:[#allocation6 + $0x60] sm:$0xff]
        %v370 = vld [vmem:[#allocation6 + $0x68] sm:$0xff]
        %v371 = vld [vmem:[#allocation6 + $0x70] sm:$0xff]
        %v372 = vld [vmem:[#allocation6 + $0x78] sm:$0xff]
        %v373 = vld [vmem:[%s2] sm:$0x1]
        %v375 = vperm.slane %v373, 0
        %377 = vmatpush.msra.mxu0 %v372
        %378 = vmatpush.msra.mxu0 %v371
        %379 = vmatpush.msra.mxu0 %v370
        %380 = vmatpush.msra.mxu0 %v369
        %381 = vmatpush.msra.mxu0 %v368
        %382 = vmatpush.msra.mxu0 %v367
        %383 = vmatpush.msra.mxu0 %v366
        %384 = vmatpush.msra.mxu0 %v365
        %385 = vmatpush.msra.mxu0 %v364
        %386 = vmatpush.msra.mxu0 %v363
        %387 = vmatpush.msra.mxu0 %v362
        %388 = vmatpush.msra.mxu0 %v361
        %389 = vmatpush.msra.mxu0 %v360
        %390 = vmatpush.msra.mxu0 %v359
        %391 = vmatpush.msra.mxu0 %v358
        %392 = vmatpush.msra.mxu0 %v357
        %393 = vmatmul.f32.gmra.mxu0 %v349
        %v394 = vpop.f32.mrf.mxu0
        %v395 = vadd.f32 %v375, %v394
        %396 = vmatmul.f32.gmra.mxu0 %v350
        %v397 = vpop.f32.mrf.mxu0
        %v398 = vadd.f32 %v375, %v397
        %399 = vmatmul.f32.gmra.mxu0 %v351
        %v400 = vpop.f32.mrf.mxu0
        %v401 = vadd.f32 %v375, %v400
        %402 = vmatmul.f32.gmra.mxu0 %v352
        %v403 = vpop.f32.mrf.mxu0
        %v404 = vadd.f32 %v375, %v403
        %405 = vmatmul.f32.gmra.mxu0 %v353
        %v406 = vpop.f32.mrf.mxu0
        %v407 = vadd.f32 %v375, %v406
        %408 = vmatmul.f32.gmra.mxu0 %v354
        %v409 = vpop.f32.mrf.mxu0
        %v410 = vadd.f32 %v375, %v409
        %411 = vmatmul.f32.gmra.mxu0 %v355
        %v412 = vpop.f32.mrf.mxu0
        %v413 = vadd.f32 %v375, %v412
        %414 = vmatmul.f32.gmra.mxu0 %v356
        %v415 = vpop.f32.mrf.mxu0
        %v416 = vadd.f32 %v375, %v415
        %417 = vdwg.mxu0
        %v418 = vmax.f32 %v395, 0.0
        %v419 = vmax.f32 %v398, 0.0
        %v420 = vmax.f32 %v401, 0.0
        %v421 = vmax.f32 %v404, 0.0
        %v422 = vmax.f32 %v407, 0.0
        %v423 = vmax.f32 %v410, 0.0
        %v424 = vmax.f32 %v413, 0.0
        %v425 = vmax.f32 %v416, 0.0
        %426 = vst [vmem:[#allocation2] sm:$0xff] 0.0
        %427 = vst [vmem:[#allocation2 + $0x8] sm:$0x3] 0.0
        %s428 = scalar_lea.vmem [#allocation2], 144
        %429 = vst [vmem:[%s428] sm:$0xff] 0.0
        %430 = vst [vmem:[%s428 + $0x8] sm:$0x3] 0.0
        %s431 = scalar_lea.vmem [#allocation2], 16
        %432 = vst [vmem:[%s431] sm:$0x1] 0.0
        %433 = vst [vmem:[%s431 + $0x10] sm:$0x1] 0.0
        %434 = vst [vmem:[%s431 + $0x20] sm:$0x1] 0.0
        %435 = vst [vmem:[%s431 + $0x30] sm:$0x1] 0.0
        %436 = vst [vmem:[%s431 + $0x40] sm:$0x1] 0.0
        %437 = vst [vmem:[%s431 + $0x50] sm:$0x1] 0.0
        %438 = vst [vmem:[%s431 + $0x60] sm:$0x1] 0.0
        %439 = vst [vmem:[%s431 + $0x70] sm:$0x1] 0.0
        %440 = vst [vmem:[%s431 + $0x9] sm:$0x1] 0.0
        %441 = vst [vmem:[%s431 + $0x19] sm:$0x1] 0.0
        %442 = vst [vmem:[%s431 + $0x29] sm:$0x1] 0.0
        %443 = vst [vmem:[%s431 + $0x39] sm:$0x1] 0.0
        %444 = vst [vmem:[%s431 + $0x49] sm:$0x1] 0.0
        %445 = vst [vmem:[%s431 + $0x59] sm:$0x1] 0.0
        %446 = vst [vmem:[%s431 + $0x69] sm:$0x1] 0.0
        %447 = vst [vmem:[%s431 + $0x79] sm:$0x1] 0.0
        %448 = vst [vmem:[%s431 + $0x1] sm:$0xff] %v418
        %449 = vst [vmem:[%s431 + $0x11] sm:$0xff] %v419
        %450 = vst [vmem:[%s431 + $0x21] sm:$0xff] %v420
        %451 = vst [vmem:[%s431 + $0x31] sm:$0xff] %v421
        %452 = vst [vmem:[%s431 + $0x41] sm:$0xff] %v422
        %453 = vst [vmem:[%s431 + $0x51] sm:$0xff] %v423
        %454 = vst [vmem:[%s431 + $0x61] sm:$0xff] %v424
        %455 = vst [vmem:[%s431 + $0x71] sm:$0xff] %v425
        %v456 = vld [vmem:[#allocation2] sm:$0xff]
        %v457 = vld [vmem:[#allocation2 + $0x8] sm:$0x3]
        %v458 = vld [vmem:[#allocation2 + $0x10] sm:$0xff]
        %v459 = vld [vmem:[#allocation2 + $0x18] sm:$0x3]
        %v460 = vld [vmem:[#allocation2 + $0x20] sm:$0xff]
        %v461 = vld [vmem:[#allocation2 + $0x28] sm:$0x3]
        %v462 = vld [vmem:[#allocation2 + $0x30] sm:$0xff]
        %v463 = vld [vmem:[#allocation2 + $0x38] sm:$0x3]
        %v464 = vld [vmem:[#allocation2 + $0x40] sm:$0xff]
        %v465 = vld [vmem:[#allocation2 + $0x48] sm:$0x3]
        %v466 = vld [vmem:[#allocation2 + $0x50] sm:$0xff]
        %v467 = vld [vmem:[#allocation2 + $0x58] sm:$0x3]
        %v468 = vld [vmem:[#allocation2 + $0x60] sm:$0xff]
        %v469 = vld [vmem:[#allocation2 + $0x68] sm:$0x3]
        %v470 = vld [vmem:[#allocation2 + $0x70] sm:$0xff]
        %v471 = vld [vmem:[#allocation2 + $0x78] sm:$0x3]
        %v472 = vld [vmem:[#allocation8] sm:$0x1]
        %v473 = vperm.slane %v472, 0
        %v474 = vmul.f32 %v456, %v473
        %v475 = vmul.f32 %v458, %v473
        %v476 = vmul.f32 %v460, %v473
        %v477 = vmul.f32 %v462, %v473
        %v478 = vmul.f32 %v464, %v473
        %v479 = vmul.f32 %v466, %v473
        %v480 = vmul.f32 %v468, %v473
        %v481 = vmul.f32 %v470, %v473
        %v482 = vadd.f32 %v474, 0.0
        %v483 = vadd.f32 %v475, 0.0
        %v484 = vadd.f32 %v476, 0.0
        %v485 = vadd.f32 %v477, 0.0
        %v486 = vadd.f32 %v478, 0.0
        %v487 = vadd.f32 %v479, 0.0
        %v488 = vadd.f32 %v480, 0.0
        %v489 = vadd.f32 %v481, 0.0
        %v490 = vld [vmem:[#allocation8 + $0x1] sm:$0x1]
        %v491 = vperm.slane %v490, 0
        %v492 = vmul.f32 %v456, %v491
        %v493 = vmul.f32 %v457, %v491
        %v494 = vmul.f32 %v458, %v491
        %v495 = vmul.f32 %v459, %v491
        %v496 = vmul.f32 %v460, %v491
        %v497 = vmul.f32 %v461, %v491
        %v498 = vmul.f32 %v462, %v491
        %v499 = vmul.f32 %v463, %v491
        %v500 = vmul.f32 %v464, %v491
        %v501 = vmul.f32 %v465, %v491
        %v502 = vmul.f32 %v466, %v491
        %v503 = vmul.f32 %v467, %v491
        %v504 = vmul.f32 %v468, %v491
        %v505 = vmul.f32 %v469, %v491
        %v506 = vmul.f32 %v470, %v491
        %v507 = vmul.f32 %v471, %v491
        %vm524 = vcmask 1046528
        %v525 = vrot.slane %v492, 1
        %v526 = vrot.slane %v493, 1
        %v527 = vsel %vm524, %v525, %v526
        %v528 = vrot.slane %v494, 1
        %v529 = vrot.slane %v495, 1
        %v530 = vsel %vm524, %v528, %v529
        %v531 = vrot.slane %v496, 1
        %v532 = vrot.slane %v497, 1
        %v533 = vsel %vm524, %v531, %v532
        %v534 = vrot.slane %v498, 1
        %v535 = vrot.slane %v499, 1
        %v536 = vsel %vm524, %v534, %v535
        %v537 = vrot.slane %v500, 1
        %v538 = vrot.slane %v501, 1
        %v539 = vsel %vm524, %v537, %v538
        %v540 = vrot.slane %v502, 1
        %v541 = vrot.slane %v503, 1
        %v542 = vsel %vm524, %v540, %v541
        %v543 = vrot.slane %v504, 1
        %v544 = vrot.slane %v505, 1
        %v545 = vsel %vm524, %v543, %v544
        %v546 = vrot.slane %v506, 1
        %v547 = vrot.slane %v507, 1
        %v548 = vsel %vm524, %v546, %v547
        %v557 = vadd.f32 %v482, %v527
        %v558 = vadd.f32 %v483, %v530
        %v559 = vadd.f32 %v484, %v533
        %v560 = vadd.f32 %v485, %v536
        %v561 = vadd.f32 %v486, %v539
        %v562 = vadd.f32 %v487, %v542
        %v563 = vadd.f32 %v488, %v545
        %v564 = vadd.f32 %v489, %v548
        %v565 = vld [vmem:[#allocation8 + $0x2] sm:$0x1]
        %v566 = vperm.slane %v565, 0
        %v567 = vmul.f32 %v456, %v566
        %v568 = vmul.f32 %v457, %v566
        %v569 = vmul.f32 %v458, %v566
        %v570 = vmul.f32 %v459, %v566
        %v571 = vmul.f32 %v460, %v566
        %v572 = vmul.f32 %v461, %v566
        %v573 = vmul.f32 %v462, %v566
        %v574 = vmul.f32 %v463, %v566
        %v575 = vmul.f32 %v464, %v566
        %v576 = vmul.f32 %v465, %v566
        %v577 = vmul.f32 %v466, %v566
        %v578 = vmul.f32 %v467, %v566
        %v579 = vmul.f32 %v468, %v566
        %v580 = vmul.f32 %v469, %v566
        %v581 = vmul.f32 %v470, %v566
        %v582 = vmul.f32 %v471, %v566
        %vm599 = vcmask 1045504
        %v600 = vrot.slane %v567, 2
        %v601 = vrot.slane %v568, 2
        %v602 = vsel %vm599, %v600, %v601
        %v603 = vrot.slane %v569, 2
        %v604 = vrot.slane %v570, 2
        %v605 = vsel %vm599, %v603, %v604
        %v606 = vrot.slane %v571, 2
        %v607 = vrot.slane %v572, 2
        %v608 = vsel %vm599, %v606, %v607
        %v609 = vrot.slane %v573, 2
        %v610 = vrot.slane %v574, 2
        %v611 = vsel %vm599, %v609, %v610
        %v612 = vrot.slane %v575, 2
        %v613 = vrot.slane %v576, 2
        %v614 = vsel %vm599, %v612, %v613
        %v615 = vrot.slane %v577, 2
        %v616 = vrot.slane %v578, 2
        %v617 = vsel %vm599, %v615, %v616
        %v618 = vrot.slane %v579, 2
        %v619 = vrot.slane %v580, 2
        %v620 = vsel %vm599, %v618, %v619
        %v621 = vrot.slane %v581, 2
        %v622 = vrot.slane %v582, 2
        %v623 = vsel %vm599, %v621, %v622
        %v632 = vadd.f32 %v557, %v602
        %v633 = vadd.f32 %v558, %v605
        %v634 = vadd.f32 %v559, %v608
        %v635 = vadd.f32 %v560, %v611
        %v636 = vadd.f32 %v561, %v614
        %v637 = vadd.f32 %v562, %v617
        %v638 = vadd.f32 %v563, %v620
        %v639 = vadd.f32 %v564, %v623
        %v640 = vld [vmem:[%s431] sm:$0xff]
        %v641 = vld [vmem:[%s431 + $0x8] sm:$0x3]
        %v642 = vld [vmem:[%s431 + $0x10] sm:$0xff]
        %v643 = vld [vmem:[%s431 + $0x18] sm:$0x3]
        %v644 = vld [vmem:[%s431 + $0x20] sm:$0xff]
        %v645 = vld [vmem:[%s431 + $0x28] sm:$0x3]
        %v646 = vld [vmem:[%s431 + $0x30] sm:$0xff]
        %v647 = vld [vmem:[%s431 + $0x38] sm:$0x3]
        %v648 = vld [vmem:[%s431 + $0x40] sm:$0xff]
        %v649 = vld [vmem:[%s431 + $0x48] sm:$0x3]
        %v650 = vld [vmem:[%s431 + $0x50] sm:$0xff]
        %v651 = vld [vmem:[%s431 + $0x58] sm:$0x3]
        %v652 = vld [vmem:[%s431 + $0x60] sm:$0xff]
        %v653 = vld [vmem:[%s431 + $0x68] sm:$0x3]
        %v654 = vld [vmem:[%s431 + $0x70] sm:$0xff]
        %v655 = vld [vmem:[%s431 + $0x78] sm:$0x3]
        %s656 = scalar_lea.vmem [#allocation8], 4
        %v657 = vld [vmem:[%s656] sm:$0x1]
        %v658 = vperm.slane %v657, 0
        %v659 = vmul.f32 %v640, %v658
        %v660 = vmul.f32 %v642, %v658
        %v661 = vmul.f32 %v644, %v658
        %v662 = vmul.f32 %v646, %v658
        %v663 = vmul.f32 %v648, %v658
        %v664 = vmul.f32 %v650, %v658
        %v665 = vmul.f32 %v652, %v658
        %v666 = vmul.f32 %v654, %v658
        %v667 = vadd.f32 %v632, %v659
        %v668 = vadd.f32 %v633, %v660
        %v669 = vadd.f32 %v634, %v661
        %v670 = vadd.f32 %v635, %v662
        %v671 = vadd.f32 %v636, %v663
        %v672 = vadd.f32 %v637, %v664
        %v673 = vadd.f32 %v638, %v665
        %v674 = vadd.f32 %v639, %v666
        %v675 = vld [vmem:[%s656 + $0x1] sm:$0x1]
        %v676 = vperm.slane %v675, 0
        %v677 = vmul.f32 %v640, %v676
        %v678 = vmul.f32 %v641, %v676
        %v679 = vmul.f32 %v642, %v676
        %v680 = vmul.f32 %v643, %v676
        %v681 = vmul.f32 %v644, %v676
        %v682 = vmul.f32 %v645, %v676
        %v683 = vmul.f32 %v646, %v676
        %v684 = vmul.f32 %v647, %v676
        %v685 = vmul.f32 %v648, %v676
        %v686 = vmul.f32 %v649, %v676
        %v687 = vmul.f32 %v650, %v676
        %v688 = vmul.f32 %v651, %v676
        %v689 = vmul.f32 %v652, %v676
        %v690 = vmul.f32 %v653, %v676
        %v691 = vmul.f32 %v654, %v676
        %v692 = vmul.f32 %v655, %v676
        %v709 = vrot.slane %v677, 1
        %v710 = vrot.slane %v678, 1
        %v711 = vsel %vm524, %v709, %v710
        %v712 = vrot.slane %v679, 1
        %v713 = vrot.slane %v680, 1
        %v714 = vsel %vm524, %v712, %v713
        %v715 = vrot.slane %v681, 1
        %v716 = vrot.slane %v682, 1
        %v717 = vsel %vm524, %v715, %v716
        %v718 = vrot.slane %v683, 1
        %v719 = vrot.slane %v684, 1
        %v720 = vsel %vm524, %v718, %v719
        %v721 = vrot.slane %v685, 1
        %v722 = vrot.slane %v686, 1
        %v723 = vsel %vm524, %v721, %v722
        %v724 = vrot.slane %v687, 1
        %v725 = vrot.slane %v688, 1
        %v726 = vsel %vm524, %v724, %v725
        %v727 = vrot.slane %v689, 1
        %v728 = vrot.slane %v690, 1
        %v729 = vsel %vm524, %v727, %v728
        %v730 = vrot.slane %v691, 1
        %v731 = vrot.slane %v692, 1
        %v732 = vsel %vm524, %v730, %v731
        %v741 = vadd.f32 %v667, %v711
        %v742 = vadd.f32 %v668, %v714
        %v743 = vadd.f32 %v669, %v717
        %v744 = vadd.f32 %v670, %v720
        %v745 = vadd.f32 %v671, %v723
        %v746 = vadd.f32 %v672, %v726
        %v747 = vadd.f32 %v673, %v729
        %v748 = vadd.f32 %v674, %v732
        %v749 = vld [vmem:[%s656 + $0x2] sm:$0x1]
        %v750 = vperm.slane %v749, 0
        %v751 = vmul.f32 %v640, %v750
        %v752 = vmul.f32 %v641, %v750
        %v753 = vmul.f32 %v642, %v750
        %v754 = vmul.f32 %v643, %v750
        %v755 = vmul.f32 %v644, %v750
        %v756 = vmul.f32 %v645, %v750
        %v757 = vmul.f32 %v646, %v750
        %v758 = vmul.f32 %v647, %v750
        %v759 = vmul.f32 %v648, %v750
        %v760 = vmul.f32 %v649, %v750
        %v761 = vmul.f32 %v650, %v750
        %v762 = vmul.f32 %v651, %v750
        %v763 = vmul.f32 %v652, %v750
        %v764 = vmul.f32 %v653, %v750
        %v765 = vmul.f32 %v654, %v750
        %v766 = vmul.f32 %v655, %v750
        %v783 = vrot.slane %v751, 2
        %v784 = vrot.slane %v752, 2
        %v785 = vsel %vm599, %v783, %v784
        %v786 = vrot.slane %v753, 2
        %v787 = vrot.slane %v754, 2
        %v788 = vsel %vm599, %v786, %v787
        %v789 = vrot.slane %v755, 2
        %v790 = vrot.slane %v756, 2
        %v791 = vsel %vm599, %v789, %v790
        %v792 = vrot.slane %v757, 2
        %v793 = vrot.slane %v758, 2
        %v794 = vsel %vm599, %v792, %v793
        %v795 = vrot.slane %v759, 2
        %v796 = vrot.slane %v760, 2
        %v797 = vsel %vm599, %v795, %v796
        %v798 = vrot.slane %v761, 2
        %v799 = vrot.slane %v762, 2
        %v800 = vsel %vm599, %v798, %v799
        %v801 = vrot.slane %v763, 2
        %v802 = vrot.slane %v764, 2
        %v803 = vsel %vm599, %v801, %v802
        %v804 = vrot.slane %v765, 2
        %v805 = vrot.slane %v766, 2
        %v806 = vsel %vm599, %v804, %v805
        %v815 = vadd.f32 %v741, %v785
        %v816 = vadd.f32 %v742, %v788
        %v817 = vadd.f32 %v743, %v791
        %v818 = vadd.f32 %v744, %v794
        %v819 = vadd.f32 %v745, %v797
        %v820 = vadd.f32 %v746, %v800
        %v821 = vadd.f32 %v747, %v803
        %v822 = vadd.f32 %v748, %v806
        %s823 = scalar_lea.vmem [#allocation2], 32
        %v824 = vld [vmem:[%s823] sm:$0xff]
        %v825 = vld [vmem:[%s823 + $0x8] sm:$0x3]
        %v826 = vld [vmem:[%s823 + $0x10] sm:$0xff]
        %v827 = vld [vmem:[%s823 + $0x18] sm:$0x3]
        %v828 = vld [vmem:[%s823 + $0x20] sm:$0xff]
        %v829 = vld [vmem:[%s823 + $0x28] sm:$0x3]
        %v830 = vld [vmem:[%s823 + $0x30] sm:$0xff]
        %v831 = vld [vmem:[%s823 + $0x38] sm:$0x3]
        %v832 = vld [vmem:[%s823 + $0x40] sm:$0xff]
        %v833 = vld [vmem:[%s823 + $0x48] sm:$0x3]
        %v834 = vld [vmem:[%s823 + $0x50] sm:$0xff]
        %v835 = vld [vmem:[%s823 + $0x58] sm:$0x3]
        %v836 = vld [vmem:[%s823 + $0x60] sm:$0xff]
        %v837 = vld [vmem:[%s823 + $0x68] sm:$0x3]
        %v838 = vld [vmem:[%s823 + $0x70] sm:$0xff]
        %v839 = vld [vmem:[%s823 + $0x78] sm:$0x3]
        %s840 = scalar_lea.vmem [#allocation8], 8
        %v841 = vld [vmem:[%s840] sm:$0x1]
        %v842 = vperm.slane %v841, 0
        %v843 = vmul.f32 %v824, %v842
        %v844 = vmul.f32 %v826, %v842
        %v845 = vmul.f32 %v828, %v842
        %v846 = vmul.f32 %v830, %v842
        %v847 = vmul.f32 %v832, %v842
        %v848 = vmul.f32 %v834, %v842
        %v849 = vmul.f32 %v836, %v842
        %v850 = vmul.f32 %v838, %v842
        %v851 = vadd.f32 %v815, %v843
        %v852 = vadd.f32 %v816, %v844
        %v853 = vadd.f32 %v817, %v845
        %v854 = vadd.f32 %v818, %v846
        %v855 = vadd.f32 %v819, %v847
        %v856 = vadd.f32 %v820, %v848
        %v857 = vadd.f32 %v821, %v849
        %v858 = vadd.f32 %v822, %v850
        %v859 = vld [vmem:[%s840 + $0x1] sm:$0x1]
        %v860 = vperm.slane %v859, 0
        %v861 = vmul.f32 %v824, %v860
        %v862 = vmul.f32 %v825, %v860
        %v863 = vmul.f32 %v826, %v860
        %v864 = vmul.f32 %v827, %v860
        %v865 = vmul.f32 %v828, %v860
        %v866 = vmul.f32 %v829, %v860
        %v867 = vmul.f32 %v830, %v860
        %v868 = vmul.f32 %v831, %v860
        %v869 = vmul.f32 %v832, %v860
        %v870 = vmul.f32 %v833, %v860
        %v871 = vmul.f32 %v834, %v860
        %v872 = vmul.f32 %v835, %v860
        %v873 = vmul.f32 %v836, %v860
        %v874 = vmul.f32 %v837, %v860
        %v875 = vmul.f32 %v838, %v860
        %v876 = vmul.f32 %v839, %v860
        %v893 = vrot.slane %v861, 1
        %v894 = vrot.slane %v862, 1
        %v895 = vsel %vm524, %v893, %v894
        %v896 = vrot.slane %v863, 1
        %v897 = vrot.slane %v864, 1
        %v898 = vsel %vm524, %v896, %v897
        %v899 = vrot.slane %v865, 1
        %v900 = vrot.slane %v866, 1
        %v901 = vsel %vm524, %v899, %v900
        %v902 = vrot.slane %v867, 1
        %v903 = vrot.slane %v868, 1
        %v904 = vsel %vm524, %v902, %v903
        %v905 = vrot.slane %v869, 1
        %v906 = vrot.slane %v870, 1
        %v907 = vsel %vm524, %v905, %v906
        %v908 = vrot.slane %v871, 1
        %v909 = vrot.slane %v872, 1
        %v910 = vsel %vm524, %v908, %v909
        %v911 = vrot.slane %v873, 1
        %v912 = vrot.slane %v874, 1
        %v913 = vsel %vm524, %v911, %v912
        %v914 = vrot.slane %v875, 1
        %v915 = vrot.slane %v876, 1
        %v916 = vsel %vm524, %v914, %v915
        %v925 = vadd.f32 %v851, %v895
        %v926 = vadd.f32 %v852, %v898
        %v927 = vadd.f32 %v853, %v901
        %v928 = vadd.f32 %v854, %v904
        %v929 = vadd.f32 %v855, %v907
        %v930 = vadd.f32 %v856, %v910
        %v931 = vadd.f32 %v857, %v913
        %v932 = vadd.f32 %v858, %v916
        %v933 = vld [vmem:[%s840 + $0x2] sm:$0x1]
        %v934 = vperm.slane %v933, 0
        %v935 = vmul.f32 %v824, %v934
        %v936 = vmul.f32 %v825, %v934
        %v937 = vmul.f32 %v826, %v934
        %v938 = vmul.f32 %v827, %v934
        %v939 = vmul.f32 %v828, %v934
        %v940 = vmul.f32 %v829, %v934
        %v941 = vmul.f32 %v830, %v934
        %v942 = vmul.f32 %v831, %v934
        %v943 = vmul.f32 %v832, %v934
        %v944 = vmul.f32 %v833, %v934
        %v945 = vmul.f32 %v834, %v934
        %v946 = vmul.f32 %v835, %v934
        %v947 = vmul.f32 %v836, %v934
        %v948 = vmul.f32 %v837, %v934
        %v949 = vmul.f32 %v838, %v934
        %v950 = vmul.f32 %v839, %v934
        %v967 = vrot.slane %v935, 2
        %v968 = vrot.slane %v936, 2
        %v969 = vsel %vm599, %v967, %v968
        %v970 = vrot.slane %v937, 2
        %v971 = vrot.slane %v938, 2
        %v972 = vsel %vm599, %v970, %v971
        %v973 = vrot.slane %v939, 2
        %v974 = vrot.slane %v940, 2
        %v975 = vsel %vm599, %v973, %v974
        %v976 = vrot.slane %v941, 2
        %v977 = vrot.slane %v942, 2
        %v978 = vsel %vm599, %v976, %v977
        %v979 = vrot.slane %v943, 2
        %v980 = vrot.slane %v944, 2
        %v981 = vsel %vm599, %v979, %v980
        %v982 = vrot.slane %v945, 2
        %v983 = vrot.slane %v946, 2
        %v984 = vsel %vm599, %v982, %v983
        %v985 = vrot.slane %v947, 2
        %v986 = vrot.slane %v948, 2
        %v987 = vsel %vm599, %v985, %v986
        %v988 = vrot.slane %v949, 2
        %v989 = vrot.slane %v950, 2
        %v990 = vsel %vm599, %v988, %v989
        %v999 = vadd.f32 %v925, %v969
        %v1000 = vadd.f32 %v926, %v972
        %v1001 = vadd.f32 %v927, %v975
        %v1002 = vadd.f32 %v928, %v978
        %v1003 = vadd.f32 %v929, %v981
        %v1004 = vadd.f32 %v930, %v984
        %v1005 = vadd.f32 %v931, %v987
        %v1006 = vadd.f32 %v932, %v990
        %v1007 = vld [vmem:[%s4] sm:$0x1]
        %v1009 = vperm.slane %v1007, 0
        %v1011 = vadd.f32 %v999, %v1009
        %v1012 = vadd.f32 %v1000, %v1009
        %v1013 = vadd.f32 %v1001, %v1009
        %v1014 = vadd.f32 %v1002, %v1009
        %v1015 = vadd.f32 %v1003, %v1009
        %v1016 = vadd.f32 %v1004, %v1009
        %v1017 = vadd.f32 %v1005, %v1009
        %v1018 = vadd.f32 %v1006, %v1009
        %v1019 = vmax.f32 %v1011, 0.0
        %v1020 = vmax.f32 %v1012, 0.0
        %v1021 = vmax.f32 %v1013, 0.0
        %v1022 = vmax.f32 %v1014, 0.0
        %v1023 = vmax.f32 %v1015, 0.0
        %v1024 = vmax.f32 %v1016, 0.0
        %v1025 = vmax.f32 %v1017, 0.0
        %v1026 = vmax.f32 %v1018, 0.0
        %v1027 = vld [vmem:[#allocation9] sm:$0xff]
        %v1028 = vld [vmem:[#allocation9 + $0x8] sm:$0xff]
        %v1029 = vld [vmem:[#allocation9 + $0x10] sm:$0xff]
        %v1030 = vld [vmem:[#allocation9 + $0x18] sm:$0xff]
        %v1031 = vld [vmem:[#allocation9 + $0x20] sm:$0xff]
        %v1032 = vld [vmem:[#allocation9 + $0x28] sm:$0xff]
        %v1033 = vld [vmem:[#allocation9 + $0x30] sm:$0xff]
        %v1034 = vld [vmem:[#allocation9 + $0x38] sm:$0xff]
        %v1035 = vld [vmem:[#allocation9 + $0x40] sm:$0xff]
        %v1036 = vld [vmem:[#allocation9 + $0x48] sm:$0xff]
        %v1037 = vld [vmem:[#allocation9 + $0x50] sm:$0xff]
        %v1038 = vld [vmem:[#allocation9 + $0x58] sm:$0xff]
        %v1039 = vld [vmem:[#allocation9 + $0x60] sm:$0xff]
        %v1040 = vld [vmem:[#allocation9 + $0x68] sm:$0xff]
        %v1041 = vld [vmem:[#allocation9 + $0x70] sm:$0xff]
        %v1042 = vld [vmem:[#allocation9 + $0x78] sm:$0xff]
        %v1043 = vld [vmem:[%s6] sm:$0x1]
        %v1045 = vperm.slane %v1043, 0
        %1047 = vmatpush.msra.mxu0 %v1042
        %1048 = vmatpush.msra.mxu0 %v1041
        %1049 = vmatpush.msra.mxu0 %v1040
        %1050 = vmatpush.msra.mxu0 %v1039
        %1051 = vmatpush.msra.mxu0 %v1038
        %1052 = vmatpush.msra.mxu0 %v1037
        %1053 = vmatpush.msra.mxu0 %v1036
        %1054 = vmatpush.msra.mxu0 %v1035
        %1055 = vmatpush.msra.mxu0 %v1034
        %1056 = vmatpush.msra.mxu0 %v1033
        %1057 = vmatpush.msra.mxu0 %v1032
        %1058 = vmatpush.msra.mxu0 %v1031
        %1059 = vmatpush.msra.mxu0 %v1030
        %1060 = vmatpush.msra.mxu0 %v1029
        %1061 = vmatpush.msra.mxu0 %v1028
        %1062 = vmatpush.msra.mxu0 %v1027
        %1063 = vmatmul.f32.gmra.mxu0 %v1019
        %v1064 = vpop.f32.mrf.mxu0
        %v1065 = vadd.f32 %v1045, %v1064
        %1066 = vmatmul.f32.gmra.mxu0 %v1020
        %v1067 = vpop.f32.mrf.mxu0
        %v1068 = vadd.f32 %v1045, %v1067
        %1069 = vmatmul.f32.gmra.mxu0 %v1021
        %v1070 = vpop.f32.mrf.mxu0
        %v1071 = vadd.f32 %v1045, %v1070
        %1072 = vmatmul.f32.gmra.mxu0 %v1022
        %v1073 = vpop.f32.mrf.mxu0
        %v1074 = vadd.f32 %v1045, %v1073
        %1075 = vmatmul.f32.gmra.mxu0 %v1023
        %v1076 = vpop.f32.mrf.mxu0
        %v1077 = vadd.f32 %v1045, %v1076
        %1078 = vmatmul.f32.gmra.mxu0 %v1024
        %v1079 = vpop.f32.mrf.mxu0
        %v1080 = vadd.f32 %v1045, %v1079
        %1081 = vmatmul.f32.gmra.mxu0 %v1025
        %v1082 = vpop.f32.mrf.mxu0
        %v1083 = vadd.f32 %v1045, %v1082
        %1084 = vmatmul.f32.gmra.mxu0 %v1026
        %v1085 = vpop.f32.mrf.mxu0
        %v1086 = vadd.f32 %v1045, %v1085
        %1087 = vdwg.mxu0
        %v1088 = vadd.f32 %v1065, %v349
        %v1089 = vadd.f32 %v1068, %v350
        %v1090 = vadd.f32 %v1071, %v351
        %v1091 = vadd.f32 %v1074, %v352
        %v1092 = vadd.f32 %v1077, %v353
        %v1093 = vadd.f32 %v1080, %v354
        %v1094 = vadd.f32 %v1083, %v355
        %v1095 = vadd.f32 %v1086, %v356
        %1096 = vst [vmem:[%s348] sm:$0xff] %v1088
        %1097 = vst [vmem:[%s348 + $0x8] sm:$0xff] %v1089
        %1098 = vst [vmem:[%s348 + $0x10] sm:$0xff] %v1090
        %1099 = vst [vmem:[%s348 + $0x18] sm:$0xff] %v1091
        %1100 = vst [vmem:[%s348 + $0x20] sm:$0xff] %v1092
        %1101 = vst [vmem:[%s348 + $0x28] sm:$0xff] %v1093
        %1102 = vst [vmem:[%s348 + $0x30] sm:$0xff] %v1094
        %1103 = vst [vmem:[%s348 + $0x38] sm:$0xff] %v1095
        %s1104 = sand.u32 %s186, 1
        %s1105 = scalar_lea.sflag [#allocation5], %s1104
        %s1106 = sand.u32 %s186, 1
        %s1107 = smul.addr %s1106, 64
        %s1108 = scalar_lea.vmem [#allocation11], %s1107
        // Predicated region
        $region65: #{tpu_custom_call.1} parent=47 // pred_check
          %p1109 = pneg %p196
        $region66: #{tpu_custom_call.1} parent=47 // pred_check_branch
          %1111 = sbr.rel (%p1109) target = $region68
        $region67: #{tpu_custom_call.1} parent=47 // pred_region
          %1113 = vsyncadd %s1105, 0
          %s1114 = smul.addr %s26, 8
          %s1115 = smul.addr %s1114, 8
          %s1116 = scalar_lea.hbm %s7, %s1115
          %s1117 = sshll.u32 %s1108, 4
          %s1118 = int_to_ptr.vmem [resolvable:$true] %s1117
          %s1119 = sshll.u32 %s1116, 4
          %s1120 = int_to_ptr.hbm [resolvable:$true] %s1119
          %1125 = dma.vmem_to_hbm [thread:$0]  %s1118, 1024, %s1120, %s1105, 128, 128, 8
        $region68: #{tpu_custom_call.1} parent=47 // pred_fallthru
          _
      $region48: #{tpu_custom_call.1} parent=5 // pred_fallthru
        _
      %p1126 = scmp.le.s32.totalorder 2, %s21
      // Predicated region
      $region69: #{tpu_custom_call.1} parent=5 // pred_check
        %p1127 = pneg %p1126
      $region70: #{tpu_custom_call.1} parent=5 // pred_check_branch
        %1129 = sbr.rel (%p1127) target = $region72
      $region71: #{tpu_custom_call.1} parent=5 // pred_region
        %s1130 = ssub.s32 %s21, 2
        // Predicated region
        $region73: #{tpu_custom_call.1} parent=71 // pred_check
          %p1131 = pneg %p202
        $region74: #{tpu_custom_call.1} parent=71 // pred_check_branch
          %1133 = sbr.rel (%p1131) target = $region76
        $region75: #{tpu_custom_call.1} parent=71 // pred_region
          %s1134 = sand.u32 %s187, 1
          %s1135 = scalar_lea.sflag [#allocation5], %s1134
          %s1136 = sand.u32 %s187, 1
          %s1137 = smul.addr %s1136, 64
          %s1138 = scalar_lea.vmem [#allocation11], %s1137
          %1140 = dma.done %s1135, 1024
        $region76: #{tpu_custom_call.1} parent=71 // pred_fallthru
          _
      $region72: #{tpu_custom_call.1} parent=5 // pred_fallthru
        _
    $region6: #{tpu_custom_call.1} parent=1 // loop_footer
      %s25 = sadd.s32 1, %s21
    $region7: #{tpu_custom_call.1} parent=1 // loop_footer_branch
      %20 = sbr.rel target = $region3
    $region8: #{tpu_custom_call.1} parent=1 // loop_exit
      _
    %1141 = vsyncpa [#allocation4], 1
    %s1142 = scalar_lea.sflag [#allocation4], 1
    %1143 = vsyncpa %s1142, 1
    %1144 = vsyncpa [#allocation7], 1
    %1145 = vsyncpa [#allocation10], 1
    %1146 = vsyncpa [#allocation5], 1
    %s1147 = scalar_lea.sflag [#allocation5], 1
    %1148 = vsyncpa %s1147, 1

</llo_original>
